<compile_context>
chip_gen: v7x
topology: tpu7x:2x2x1
jax: 0.10.0
libtpu: 0.0.40
codegen_flags: <defaults>
</compile_context>

<pallas_src>
import jax
import jax.numpy as jnp
import numpy as np
from jax.experimental import pallas as pl
from jax.experimental.pallas import tpu as pltpu

_IN, _HID, _OUT = 4, 10, 1
_NH = 12           # 10 real hidden units + 1 bias unit (for b2) + 1 zero pad -> 3 lane chunks
_LANES = 128       # one row of the reshaped input = 32 batch elements * 4 features
_BPR = _LANES // _IN   # batch elements per 128-lane row (= 32)


def _round_up(n, m):
    return ((n + m - 1) // m) * m


def _mlp_kernel(a_ref, b1_ref, w2_ref, x_ref, o_ref):
    """One grid step over `tr` rows (= 32*tr batch elements).

    a_ref : (128, 384)  packed layer-1 weights: A[4k+f, 32j+q] = W1[j,f]*delta(k,q)
    b1_ref: (1,   384)  packed layer-1 bias:    b1_pat[0, 32j+q] = b1[j]
    w2_ref: (384, 32)   packed layer-2 weights: W2[32j+q, k]    = w2[j]*delta(q,k)
    x_ref : (tr,  128)  32 batch elements per row, features interleaved in lanes
    o_ref : (tr,  32)   y for batch element 32*row + lane
    """
    x = x_ref[...]                                                    # (tr, 128)
    # Layer 1: MXU does the de-interleave + K=4 contraction in one dot.
    z = jnp.dot(x, a_ref[...], preferred_element_type=jnp.float32)   # (tr, 384)
    h = jnp.maximum(z + b1_ref[...], 0.0)                            # bias + ReLU (VPU)
    # Layer 2 (+ b2 via the folded bias unit): MXU again, lane-dense (tr, 32) out.
    y = jnp.dot(h, w2_ref[...], preferred_element_type=jnp.float32)  # (tr, 32)
    o_ref[...] = y.astype(o_ref.dtype)


def _pick_rows_per_block(n_rows, block_batch):
    """Rows (of 32 batch elements) per grid step.

    Targets ~`block_batch` batch elements per step (big, lane-dense DMAs) while
    keeping >= ~8 grid steps for large batches (v7x megacore sharding) and
    never exceeding the array itself for tiny batches.
    """
    tr_max = max(8, _round_up(block_batch, 8 * _BPR) // _BPR)      # multiple of 8
    rows_for_8_steps = _round_up(pl.cdiv(n_rows, 8), 8)            # >= ~8 steps
    floor_rows = min(256, _round_up(n_rows, 8))                    # avoid tiny steps
    tr = min(tr_max, max(floor_rows, rows_for_8_steps))
    return min(tr, n_rows)        # either a multiple of 8 or == full row count


def net_forward(x, w1, b1, w2, b2, *, block_batch=32768):
    """Forward pass of Net.

    x : (B, 4) float32            (PyTorch nn.Linear input layout)
    w1: (10, 4)  b1: (10,)        (PyTorch weight/bias layout)
    w2: (1, 10)  b2: (1,)
    returns (B, 1) float32
    """
    assert x.shape[1] == _IN
    B = x.shape[0]
    x = x.astype(jnp.float32)

    # --- Input relayout: FREE reshape, no transpose / full-array pad pass. ---
    n_rows = pl.cdiv(B, _BPR)         # rows of 32 batch elements
    b_pad = n_rows * _BPR
    if b_pad != B:
        # Only the <32-element tail needs padding (one small copy; B % 32 == 0
        # pays nothing).  Never padded up to a full tile (review item).
        x = jnp.zeros((b_pad, _IN), jnp.float32).at[:B, :].set(x)
    xr = jnp.reshape(x, (n_rows, _LANES))   # same row-major order -> free

    # --- Pack parameters into two small block-diagonal matrices + bias row. ---
    w1f = w1.astype(jnp.float32).reshape(_HID, _IN)
    b1f = b1.astype(jnp.float32).reshape(_HID)
    w2f = w2.astype(jnp.float32).reshape(_HID)
    b2f = b2.astype(jnp.float32).reshape(())

    w1p = jnp.zeros((_NH, _IN), jnp.float32).at[:_HID].set(w1f)
    b1p = jnp.zeros((_NH,), jnp.float32).at[:_HID].set(b1f).at[_HID].set(1.0)
    w2p = jnp.zeros((_NH,), jnp.float32).at[:_HID].set(w2f).at[_HID].set(b2f)
    # Unit #10 has zero input weights, bias 1.0 and output weight b2, i.e. it
    # contributes b2 * relu(1) = b2 to every output: b2 folded into the matmuls.

    eye = jnp.eye(_BPR, dtype=jnp.float32)
    # a_mat[4k+f, 32j+q] = W1p[j, f] * delta(k, q)
    a_mat = jnp.einsum("kq,jf->kfjq", eye, w1p).reshape(_LANES, _BPR * _NH)
    # b1_pat[0, 32j+q] = b1p[j]
    b1_pat = jnp.repeat(b1p, _BPR).reshape(1, _BPR * _NH)
    # w2_mat[32j+q, k] = w2p[j] * delta(q, k)
    w2_mat = jnp.einsum("j,qk->jqk", w2p, eye).reshape(_BPR * _NH, _BPR)

    # --- Tiling: big lane-dense steps, ragged last block, parallel grid. ---
    tr = _pick_rows_per_block(n_rows, block_batch)
    grid = (pl.cdiv(n_rows, tr),)

    out = pl.pallas_call(
        _mlp_kernel,
        out_shape=jax.ShapeDtypeStruct((n_rows, _BPR), jnp.float32),
        grid=grid,
        in_specs=[
            # Packed parameters: constant index_map -> VMEM-resident across steps.
            pl.BlockSpec((_LANES, _BPR * _NH), lambda i: (0, 0)),
            pl.BlockSpec((1, _BPR * _NH), lambda i: (0, 0)),
            pl.BlockSpec((_BPR * _NH, _BPR), lambda i: (0, 0)),
            # x rows, pipelined over the (parallel) batch grid.
            pl.BlockSpec((tr, _LANES), lambda i: (i, 0)),
        ],
        out_specs=pl.BlockSpec((tr, _BPR), lambda i: (i, 0)),
        compiler_params=pltpu.CompilerParams(
            dimension_semantics=("parallel",)),
    )(a_mat, b1_pat, w2_mat, xr)

    # Back to the PyTorch (B, 1) layout; reshape is free, slice drops tail pad.
    return out.reshape(b_pad)[:B].reshape(B, _OUT)


if __name__ == "__main__":
    key = jax.random.PRNGKey(0)
    k_x, k_w1, k_b1, k_w2, k_b2 = jax.random.split(key, 5)

    # Deterministic parameters in PyTorch nn.Linear layout: weight (out, in), bias (out,).
    w1 = jax.random.normal(k_w1, (_HID, _IN), jnp.float32) * 0.1
    b1 = jax.random.normal(k_b1, (_HID,), jnp.float32) * 0.1
    w2 = jax.random.normal(k_w2, (_OUT, _HID), jnp.float32) * 0.1
    b2 = jax.random.normal(k_b2, (_OUT,), jnp.float32) * 0.1

    w1n, b1n = np.asarray(w1), np.asarray(b1)
    w2n, b2n = np.asarray(w2), np.asarray(b2)

    # B=8: tiny batch (tail-pad path, single block == full array).
    # B=1000: non-multiple-of-32 batch, single block.
    # B=9000: multi-step grid with a ragged (masked) last block.
    for B in (8, 1000, 9000):
        x = jax.random.normal(jax.random.fold_in(k_x, B), (B, _IN), jnp.float32)
        out = net_forward(x, w1, b1, w2, b2)
        jax.block_until_ready(out)
        assert out.shape == (B, _OUT)

        xn = np.asarray(x)
        ref = np.maximum(xn @ w1n.T + b1n, 0.0) @ w2n.T + b2n   # exact f32 reference
        assert np.allclose(np.asarray(out), ref, atol=1e-3, rtol=1e-3), (
            f"mismatch vs reference at B={B}")

    print("KERNEL_OK")
</pallas_src>

<mosaic_0001>
module attributes {stable_mosaic.version = 11 : i64} {
  func.func @_mlp_kernel(%arg0: i32, %arg1: memref<128x384xf32, #tpu.memory_space<vmem>>, %arg2: memref<1x384xf32, #tpu.memory_space<vmem>>, %arg3: memref<384x32xf32, #tpu.memory_space<vmem>>, %arg4: memref<1x128xf32, #tpu.memory_space<vmem>>, %arg5: memref<1x32xf32, #tpu.memory_space<vmem>>) attributes {dimension_semantics = [#tpu.dimension_semantics<parallel>], iteration_bounds = array<i64: 1>, scalar_prefetch = 0 : i64, scratch_operands = 0 : i64, tpu.core_type = #tpu.core_type<tc>, window_params = [{pipeline_mode = #tpu.pipeline_mode<synchronous>, transform_indices = @transform_0, window_bounds = array<i64: 128, 384>}, {pipeline_mode = #tpu.pipeline_mode<synchronous>, transform_indices = @transform_1, window_bounds = array<i64: 1, 384>}, {pipeline_mode = #tpu.pipeline_mode<synchronous>, transform_indices = @transform_2, window_bounds = array<i64: 384, 32>}, {transform_indices = @transform_3, window_bounds = array<i64: 1, 128>}, {transform_indices = @transform_4, window_bounds = array<i64: 1, 32>}]} {
    %c0 = arith.constant 0 : index
    %c0_0 = arith.constant 0 : index
    %0 = vector.load %arg4[%c0, %c0_0] : memref<1x128xf32, #tpu.memory_space<vmem>>, vector<1x128xf32>
    %c0_1 = arith.constant 0 : index
    %c0_2 = arith.constant 0 : index
    %1 = vector.load %arg1[%c0_1, %c0_2] : memref<128x384xf32, #tpu.memory_space<vmem>>, vector<128x384xf32>
    %cst = arith.constant dense<0.000000e+00> : vector<1x384xf32>
    %2 = tpu.matmul %0, %1, %cst {dimension_numbers = #tpu.dot_dimension_numbers<[1], [0], [0], [1], [0, 0, 1, 1], [], []>} : vector<1x128xf32>, vector<128x384xf32>, vector<1x384xf32> -> vector<1x384xf32>
    %c0_3 = arith.constant 0 : index
    %c0_4 = arith.constant 0 : index
    %3 = vector.load %arg2[%c0_3, %c0_4] : memref<1x384xf32, #tpu.memory_space<vmem>>, vector<1x384xf32>
    %4 = arith.addf %2, %3 : vector<1x384xf32>
    %cst_5 = arith.constant 0.000000e+00 : f32
    %5 = vector.broadcast %cst_5 : f32 to vector<1x384xf32>
    %6 = arith.maximumf %4, %5 : vector<1x384xf32>
    %c0_6 = arith.constant 0 : index
    %c0_7 = arith.constant 0 : index
    %7 = vector.load %arg3[%c0_6, %c0_7] : memref<384x32xf32, #tpu.memory_space<vmem>>, vector<384x32xf32>
    %cst_8 = arith.constant dense<0.000000e+00> : vector<1x32xf32>
    %8 = tpu.matmul %6, %7, %cst_8 {dimension_numbers = #tpu.dot_dimension_numbers<[1], [0], [0], [1], [0, 0, 1, 1], [], []>} : vector<1x384xf32>, vector<384x32xf32>, vector<1x32xf32> -> vector<1x32xf32>
    %c0_9 = arith.constant 0 : index
    %c0_10 = arith.constant 0 : index
    %9 = vector.load %arg5[%c0_9, %c0_10] : memref<1x32xf32, #tpu.memory_space<vmem>>, vector<1x32xf32>
    tpu.vector_store %arg5[%c0_9, %c0_10], %8 {strides = array<i32>} : memref<1x32xf32, #tpu.memory_space<vmem>>, vector<1x32xf32>,
    return
  }
  func.func @transform_0(%arg0: i32) -> (i32, i32) {
    %c0_i32 = arith.constant 0 : i32
    %c0_i32_0 = arith.constant 0 : i32
    %c0_i32_1 = arith.constant 0 : i32
    return %c0_i32, %c0_i32_0 : i32, i32
  }
  func.func @transform_1(%arg0: i32) -> (i32, i32) {
    %c0_i32 = arith.constant 0 : i32
    %c0_i32_0 = arith.constant 0 : i32
    %c0_i32_1 = arith.constant 0 : i32
    return %c0_i32, %c0_i32_0 : i32, i32
  }
  func.func @transform_2(%arg0: i32) -> (i32, i32) {
    %c0_i32 = arith.constant 0 : i32
    %c0_i32_0 = arith.constant 0 : i32
    %c0_i32_1 = arith.constant 0 : i32
    return %c0_i32, %c0_i32_0 : i32, i32
  }
  func.func @transform_3(%arg0: i32) -> (i32, i32) {
    %c0_i32 = arith.constant 0 : i32
    %c0_i32_0 = arith.constant 0 : i32
    return %arg0, %c0_i32 : i32, i32
  }
  func.func @transform_4(%arg0: i32) -> (i32, i32) {
    %c0_i32 = arith.constant 0 : i32
    %c0_i32_0 = arith.constant 0 : i32
    return %arg0, %c0_i32 : i32, i32
  }
}

</mosaic_0001>

<llo_original>
// kernel: tpu_custom_call.1
$region0: #{tpu_custom_call.1}
  #allocation0 [shape = 'u32[]', space=smem, size = 0x4, offset = 0x4, fixed_abs, tag = 'smem constant byte address 0x4 - core index']
  #allocation1 [shape = 'u32[144,128]{1,0:T(1,128)}', space=vmem, size = 0x12000, scoped, tag = 'internal scratch']
  %s0 = inlined_call_operand.vmem [shape: f32[128,384], index: 0, kind: input, shape index: {}]
  %s1 = inlined_call_operand.vmem [shape: f32[1,384], index: 1, kind: input, shape index: {}]
  %s2 = inlined_call_operand.vmem [shape: f32[384,32], index: 2, kind: input, shape index: {}]
  %s3 = inlined_call_operand.vmem [shape: f32[1,128], index: 3, kind: input, shape index: {}]
  %s4 = inlined_call_operand.hbm [shape: f32[1,32], index: 4, kind: output, shape index: {}]
  %s5 = sld [smem:[#allocation0]]
  $region26: #{tpu_custom_call.1} parent=0
    _
  %s7 = ssub.s32 1, %s5
  %s8 = scalar_select 0, %s7, %s5
  $region1: #{tpu_custom_call.1} parent=0
    #allocation2 [shape = 'u8[512]{0}', space=vmem, size = 0x400, scoped, tag = 'output window, operand 0, single buffered']
    #allocation3 [shape = 's32[1]{0}', space=sflag, size = 0x4, scoped, tag = 'scoped memory for tpu_custom_call.1']
    %9 = vsyncpa [#allocation3], 0
    // Predicated region
    $region2: #{tpu_custom_call.1} parent=1 // pred_check
      _
    $region3: #{tpu_custom_call.1} parent=1 // pred_check_branch
      %11 = sbr.rel (0) target = $region5
    $region4: #{tpu_custom_call.1} parent=1 // pred_region
      _
    $region5: #{tpu_custom_call.1} parent=1 // pred_fallthru
      _
    // Predicated region
    $region6: #{tpu_custom_call.1} parent=1 // pred_check
      _
    $region7: #{tpu_custom_call.1} parent=1 // pred_check_branch
      %13 = sbr.rel (0) target = $region9
    $region8: #{tpu_custom_call.1} parent=1 // pred_region
      _
    $region9: #{tpu_custom_call.1} parent=1 // pred_fallthru
      _
    // Predicated region
    $region10: #{tpu_custom_call.1} parent=1 // pred_check
      _
    $region11: #{tpu_custom_call.1} parent=1 // pred_check_branch
      %15 = sbr.rel (0) target = $region13
    $region12: #{tpu_custom_call.1} parent=1 // pred_region
      _
    $region13: #{tpu_custom_call.1} parent=1 // pred_fallthru
      _
    // Predicated region
    $region14: #{tpu_custom_call.1} parent=1 // pred_check
      _
    $region15: #{tpu_custom_call.1} parent=1 // pred_check_branch
      %17 = sbr.rel (0) target = $region17
    $region16: #{tpu_custom_call.1} parent=1 // pred_region
      _
    $region17: #{tpu_custom_call.1} parent=1 // pred_fallthru
      _
    %v18 = vld [vmem:[%s3] sm:$0x1]
    %v19 = vld [vmem:[%s0] sm:$0xff]
    %v20 = vld [vmem:[%s0 + $0x8] sm:$0xff]
    %v21 = vld [vmem:[%s0 + $0x10] sm:$0xff]
    %v22 = vld [vmem:[%s0 + $0x18] sm:$0xff]
    %v23 = vld [vmem:[%s0 + $0x20] sm:$0xff]
    %v24 = vld [vmem:[%s0 + $0x28] sm:$0xff]
    %v25 = vld [vmem:[%s0 + $0x30] sm:$0xff]
    %v26 = vld [vmem:[%s0 + $0x38] sm:$0xff]
    %v27 = vld [vmem:[%s0 + $0x40] sm:$0xff]
    %v28 = vld [vmem:[%s0 + $0x48] sm:$0xff]
    %v29 = vld [vmem:[%s0 + $0x50] sm:$0xff]
    %v30 = vld [vmem:[%s0 + $0x58] sm:$0xff]
    %v31 = vld [vmem:[%s0 + $0x60] sm:$0xff]
    %v32 = vld [vmem:[%s0 + $0x68] sm:$0xff]
    %v33 = vld [vmem:[%s0 + $0x70] sm:$0xff]
    %v34 = vld [vmem:[%s0 + $0x78] sm:$0xff]
    %v35 = vld [vmem:[%s0 + $0x80] sm:$0xff]
    %v36 = vld [vmem:[%s0 + $0x88] sm:$0xff]
    %v37 = vld [vmem:[%s0 + $0x90] sm:$0xff]
    %v38 = vld [vmem:[%s0 + $0x98] sm:$0xff]
    %v39 = vld [vmem:[%s0 + $0xa0] sm:$0xff]
    %v40 = vld [vmem:[%s0 + $0xa8] sm:$0xff]
    %v41 = vld [vmem:[%s0 + $0xb0] sm:$0xff]
    %v42 = vld [vmem:[%s0 + $0xb8] sm:$0xff]
    %v43 = vld [vmem:[%s0 + $0xc0] sm:$0xff]
    %v44 = vld [vmem:[%s0 + $0xc8] sm:$0xff]
    %v45 = vld [vmem:[%s0 + $0xd0] sm:$0xff]
    %v46 = vld [vmem:[%s0 + $0xd8] sm:$0xff]
    %v47 = vld [vmem:[%s0 + $0xe0] sm:$0xff]
    %v48 = vld [vmem:[%s0 + $0xe8] sm:$0xff]
    %v49 = vld [vmem:[%s0 + $0xf0] sm:$0xff]
    %v50 = vld [vmem:[%s0 + $0xf8] sm:$0xff]
    %v51 = vld [vmem:[%s0 + $0x100] sm:$0xff]
    %v52 = vld [vmem:[%s0 + $0x108] sm:$0xff]
    %v53 = vld [vmem:[%s0 + $0x110] sm:$0xff]
    %v54 = vld [vmem:[%s0 + $0x118] sm:$0xff]
    %v55 = vld [vmem:[%s0 + $0x120] sm:$0xff]
    %v56 = vld [vmem:[%s0 + $0x128] sm:$0xff]
    %v57 = vld [vmem:[%s0 + $0x130] sm:$0xff]
    %v58 = vld [vmem:[%s0 + $0x138] sm:$0xff]
    %v59 = vld [vmem:[%s0 + $0x140] sm:$0xff]
    %v60 = vld [vmem:[%s0 + $0x148] sm:$0xff]
    %v61 = vld [vmem:[%s0 + $0x150] sm:$0xff]
    %v62 = vld [vmem:[%s0 + $0x158] sm:$0xff]
    %v63 = vld [vmem:[%s0 + $0x160] sm:$0xff]
    %v64 = vld [vmem:[%s0 + $0x168] sm:$0xff]
    %v65 = vld [vmem:[%s0 + $0x170] sm:$0xff]
    %v66 = vld [vmem:[%s0 + $0x178] sm:$0xff]
    %v67 = vld [vmem:[%s1] sm:$0x7]
    %v69 = vlaneseq
    %v70 = vshrl.u32 %v69, 7
    %v71 = vsub.s32 0, %v70
    %v72 = vrot.slane %v67, %v71
    %v73 = vlaneseq
    %v74 = vshrl.u32 %v73, 7
    %v75 = vsub.s32 1, %v74
    %v76 = vrot.slane %v67, %v75
    %v77 = vlaneseq
    %v78 = vshrl.u32 %v77, 7
    %v79 = vsub.s32 2, %v78
    %v80 = vrot.slane %v67, %v79
    %84 = vmatprep.subr.mxu0 %v20
    %85 = vmatpush1.msra.mxu0 %v19
    %86 = vmatprep.subr.mxu0 %v23
    %87 = vmatpush1.msra.mxu0 %v22
    %88 = vmatprep.subr.mxu0 %v26
    %89 = vmatpush1.msra.mxu0 %v25
    %90 = vmatprep.subr.mxu0 %v29
    %91 = vmatpush1.msra.mxu0 %v28
    %92 = vmatprep.subr.mxu0 %v32
    %93 = vmatpush1.msra.mxu0 %v31
    %94 = vmatprep.subr.mxu0 %v35
    %95 = vmatpush1.msra.mxu0 %v34
    %96 = vmatprep.subr.mxu0 %v38
    %97 = vmatpush1.msra.mxu0 %v37
    %98 = vmatprep.subr.mxu0 %v41
    %99 = vmatpush1.msra.mxu0 %v40
    %100 = vmatprep.subr.mxu0 %v44
    %101 = vmatpush1.msra.mxu0 %v43
    %102 = vmatprep.subr.mxu0 %v47
    %103 = vmatpush1.msra.mxu0 %v46
    %104 = vmatprep.subr.mxu0 %v50
    %105 = vmatpush1.msra.mxu0 %v49
    %106 = vmatprep.subr.mxu0 %v53
    %107 = vmatpush1.msra.mxu0 %v52
    %108 = vmatprep.subr.mxu0 %v56
    %109 = vmatpush1.msra.mxu0 %v55
    %110 = vmatprep.subr.mxu0 %v59
    %111 = vmatpush1.msra.mxu0 %v58
    %112 = vmatprep.subr.mxu0 %v62
    %113 = vmatpush1.msra.mxu0 %v61
    %114 = vmatprep.subr.mxu0 %v65
    %115 = vmatpush1.msra.mxu0 %v64
    %116 = vmatprep.subr.mxu0 0.0
    %117 = vmatpush1.msra.mxu0 0.0
    %118 = vmatprep.subr.mxu0 0.0
    %119 = vmatpush1.msra.mxu0 0.0
    %120 = vmatprep.subr.mxu0 0.0
    %121 = vmatpush1.msra.mxu0 0.0
    %122 = vmatprep.subr.mxu0 0.0
    %123 = vmatpush1.msra.mxu0 0.0
    %124 = vmatprep.subr.mxu0 0.0
    %125 = vmatpush1.msra.mxu0 0.0
    %126 = vmatprep.subr.mxu0 0.0
    %127 = vmatpush1.msra.mxu0 0.0
    %128 = vmatprep.subr.mxu0 0.0
    %129 = vmatpush1.msra.mxu0 0.0
    %130 = vmatprep.subr.mxu0 0.0
    %131 = vmatpush1.msra.mxu0 0.0
    %132 = vmatprep.subr.mxu0 0.0
    %133 = vmatpush1.msra.mxu0 0.0
    %134 = vmatprep.subr.mxu0 0.0
    %135 = vmatpush1.msra.mxu0 0.0
    %136 = vmatprep.subr.mxu0 0.0
    %137 = vmatpush1.msra.mxu0 0.0
    %138 = vmatprep.subr.mxu0 0.0
    %139 = vmatpush1.msra.mxu0 0.0
    %140 = vmatprep.subr.mxu0 0.0
    %141 = vmatpush1.msra.mxu0 0.0
    %142 = vmatprep.subr.mxu0 0.0
    %143 = vmatpush1.msra.mxu0 0.0
    %144 = vmatprep.subr.mxu0 0.0
    %145 = vmatpush1.msra.mxu0 0.0
    %146 = vmatprep.subr.mxu0 0.0
    %147 = vmatpush1.msra.mxu0 0.0
    %148 = vmatprep.mubr.f32.mxu0 0.0
    %149 = vmatmul.mubr.f32.gmra.mrb[0].mxu0 %v18
    %v150 = vpop.f32.mrb[0].mxu0
    %v151 = vadd.f32 %v72, %v150
    %v152 = vpop.f32.mrb[0].mxu0
    %v153 = vadd.f32 %v76, %v152
    %154 = vdwg.mxu0
    %155 = vmatprep.subr.mxu0 0.0
    %156 = vmatpush1.msra.mxu0 %v21
    %157 = vmatprep.subr.mxu0 0.0
    %158 = vmatpush1.msra.mxu0 %v24
    %159 = vmatprep.subr.mxu0 0.0
    %160 = vmatpush1.msra.mxu0 %v27
    %161 = vmatprep.subr.mxu0 0.0
    %162 = vmatpush1.msra.mxu0 %v30
    %163 = vmatprep.subr.mxu0 0.0
    %164 = vmatpush1.msra.mxu0 %v33
    %165 = vmatprep.subr.mxu0 0.0
    %166 = vmatpush1.msra.mxu0 %v36
    %167 = vmatprep.subr.mxu0 0.0
    %168 = vmatpush1.msra.mxu0 %v39
    %169 = vmatprep.subr.mxu0 0.0
    %170 = vmatpush1.msra.mxu0 %v42
    %171 = vmatprep.subr.mxu0 0.0
    %172 = vmatpush1.msra.mxu0 %v45
    %173 = vmatprep.subr.mxu0 0.0
    %174 = vmatpush1.msra.mxu0 %v48
    %175 = vmatprep.subr.mxu0 0.0
    %176 = vmatpush1.msra.mxu0 %v51
    %177 = vmatprep.subr.mxu0 0.0
    %178 = vmatpush1.msra.mxu0 %v54
    %179 = vmatprep.subr.mxu0 0.0
    %180 = vmatpush1.msra.mxu0 %v57
    %181 = vmatprep.subr.mxu0 0.0
    %182 = vmatpush1.msra.mxu0 %v60
    %183 = vmatprep.subr.mxu0 0.0
    %184 = vmatpush1.msra.mxu0 %v63
    %185 = vmatprep.subr.mxu0 0.0
    %186 = vmatpush1.msra.mxu0 %v66
    %187 = vmatprep.subr.mxu0 0.0
    %188 = vmatpush1.msra.mxu0 0.0
    %189 = vmatprep.subr.mxu0 0.0
    %190 = vmatpush1.msra.mxu0 0.0
    %191 = vmatprep.subr.mxu0 0.0
    %192 = vmatpush1.msra.mxu0 0.0
    %193 = vmatprep.subr.mxu0 0.0
    %194 = vmatpush1.msra.mxu0 0.0
    %195 = vmatprep.subr.mxu0 0.0
    %196 = vmatpush1.msra.mxu0 0.0
    %197 = vmatprep.subr.mxu0 0.0
    %198 = vmatpush1.msra.mxu0 0.0
    %199 = vmatprep.subr.mxu0 0.0
    %200 = vmatpush1.msra.mxu0 0.0
    %201 = vmatprep.subr.mxu0 0.0
    %202 = vmatpush1.msra.mxu0 0.0
    %203 = vmatprep.subr.mxu0 0.0
    %204 = vmatpush1.msra.mxu0 0.0
    %205 = vmatprep.subr.mxu0 0.0
    %206 = vmatpush1.msra.mxu0 0.0
    %207 = vmatprep.subr.mxu0 0.0
    %208 = vmatpush1.msra.mxu0 0.0
    %209 = vmatprep.subr.mxu0 0.0
    %210 = vmatpush1.msra.mxu0 0.0
    %211 = vmatprep.subr.mxu0 0.0
    %212 = vmatpush1.msra.mxu0 0.0
    %213 = vmatprep.subr.mxu0 0.0
    %214 = vmatpush1.msra.mxu0 0.0
    %215 = vmatprep.subr.mxu0 0.0
    %216 = vmatpush1.msra.mxu0 0.0
    %217 = vmatprep.subr.mxu0 0.0
    %218 = vmatpush1.msra.mxu0 0.0
    %219 = vmatprep.mubr.f32.mxu0 0.0
    %220 = vmatmul.mubr.f32.gmra.mrb[0].mxu0 %v18
    %v221 = vpop.f32.mrb[0].mxu0
    %v222 = vadd.f32 %v80, %v221
    %v223 = vpop.f32.mrb[0].mxu0
    %224 = vdwg.mxu0
    %v225 = vmax.f32 %v151, 0.0
    %v226 = vmax.f32 %v153, 0.0
    %v227 = vmax.f32 %v222, 0.0
    %v228 = vld [vmem:[%s2] sm:$0xff]
    %v229 = vld [vmem:[%s2 + $0x8] sm:$0xff]
    %v230 = vld [vmem:[%s2 + $0x10] sm:$0xff]
    %v231 = vld [vmem:[%s2 + $0x18] sm:$0xff]
    %v232 = vld [vmem:[%s2 + $0x20] sm:$0xff]
    %v233 = vld [vmem:[%s2 + $0x28] sm:$0xff]
    %v234 = vld [vmem:[%s2 + $0x30] sm:$0xff]
    %v235 = vld [vmem:[%s2 + $0x38] sm:$0xff]
    %v236 = vld [vmem:[%s2 + $0x40] sm:$0xff]
    %v237 = vld [vmem:[%s2 + $0x48] sm:$0xff]
    %v238 = vld [vmem:[%s2 + $0x50] sm:$0xff]
    %v239 = vld [vmem:[%s2 + $0x58] sm:$0xff]
    %v240 = vld [vmem:[%s2 + $0x60] sm:$0xff]
    %v241 = vld [vmem:[%s2 + $0x68] sm:$0xff]
    %v242 = vld [vmem:[%s2 + $0x70] sm:$0xff]
    %v243 = vld [vmem:[%s2 + $0x78] sm:$0xff]
    %v244 = vld [vmem:[%s2 + $0x80] sm:$0xff]
    %v245 = vld [vmem:[%s2 + $0x88] sm:$0xff]
    %v246 = vld [vmem:[%s2 + $0x90] sm:$0xff]
    %v247 = vld [vmem:[%s2 + $0x98] sm:$0xff]
    %v248 = vld [vmem:[%s2 + $0xa0] sm:$0xff]
    %v249 = vld [vmem:[%s2 + $0xa8] sm:$0xff]
    %v250 = vld [vmem:[%s2 + $0xb0] sm:$0xff]
    %v251 = vld [vmem:[%s2 + $0xb8] sm:$0xff]
    %v252 = vld [vmem:[%s2 + $0xc0] sm:$0xff]
    %v253 = vld [vmem:[%s2 + $0xc8] sm:$0xff]
    %v254 = vld [vmem:[%s2 + $0xd0] sm:$0xff]
    %v255 = vld [vmem:[%s2 + $0xd8] sm:$0xff]
    %v256 = vld [vmem:[%s2 + $0xe0] sm:$0xff]
    %v257 = vld [vmem:[%s2 + $0xe8] sm:$0xff]
    %v258 = vld [vmem:[%s2 + $0xf0] sm:$0xff]
    %v259 = vld [vmem:[%s2 + $0xf8] sm:$0xff]
    %v260 = vld [vmem:[%s2 + $0x100] sm:$0xff]
    %v261 = vld [vmem:[%s2 + $0x108] sm:$0xff]
    %v262 = vld [vmem:[%s2 + $0x110] sm:$0xff]
    %v263 = vld [vmem:[%s2 + $0x118] sm:$0xff]
    %v264 = vld [vmem:[%s2 + $0x120] sm:$0xff]
    %v265 = vld [vmem:[%s2 + $0x128] sm:$0xff]
    %v266 = vld [vmem:[%s2 + $0x130] sm:$0xff]
    %v267 = vld [vmem:[%s2 + $0x138] sm:$0xff]
    %v268 = vld [vmem:[%s2 + $0x140] sm:$0xff]
    %v269 = vld [vmem:[%s2 + $0x148] sm:$0xff]
    %v270 = vld [vmem:[%s2 + $0x150] sm:$0xff]
    %v271 = vld [vmem:[%s2 + $0x158] sm:$0xff]
    %v272 = vld [vmem:[%s2 + $0x160] sm:$0xff]
    %v273 = vld [vmem:[%s2 + $0x168] sm:$0xff]
    %v274 = vld [vmem:[%s2 + $0x170] sm:$0xff]
    %v275 = vld [vmem:[%s2 + $0x178] sm:$0xff]
    %276 = vmatprep.subr.mxu0 0.0
    %277 = vmatpush1.msra.mxu0 %v228
    %278 = vmatprep.subr.mxu0 0.0
    %279 = vmatpush1.msra.mxu0 %v229
    %280 = vmatprep.subr.mxu0 0.0
    %281 = vmatpush1.msra.mxu0 %v230
    %282 = vmatprep.subr.mxu0 0.0
    %283 = vmatpush1.msra.mxu0 %v231
    %284 = vmatprep.subr.mxu0 0.0
    %285 = vmatpush1.msra.mxu0 %v232
    %286 = vmatprep.subr.mxu0 0.0
    %287 = vmatpush1.msra.mxu0 %v233
    %288 = vmatprep.subr.mxu0 0.0
    %289 = vmatpush1.msra.mxu0 %v234
    %290 = vmatprep.subr.mxu0 0.0
    %291 = vmatpush1.msra.mxu0 %v235
    %292 = vmatprep.subr.mxu0 0.0
    %293 = vmatpush1.msra.mxu0 %v236
    %294 = vmatprep.subr.mxu0 0.0
    %295 = vmatpush1.msra.mxu0 %v237
    %296 = vmatprep.subr.mxu0 0.0
    %297 = vmatpush1.msra.mxu0 %v238
    %298 = vmatprep.subr.mxu0 0.0
    %299 = vmatpush1.msra.mxu0 %v239
    %300 = vmatprep.subr.mxu0 0.0
    %301 = vmatpush1.msra.mxu0 %v240
    %302 = vmatprep.subr.mxu0 0.0
    %303 = vmatpush1.msra.mxu0 %v241
    %304 = vmatprep.subr.mxu0 0.0
    %305 = vmatpush1.msra.mxu0 %v242
    %306 = vmatprep.subr.mxu0 0.0
    %307 = vmatpush1.msra.mxu0 %v243
    %308 = vmatprep.subr.mxu0 0.0
    %309 = vmatpush1.msra.mxu0 %v244
    %310 = vmatprep.subr.mxu0 0.0
    %311 = vmatpush1.msra.mxu0 %v245
    %312 = vmatprep.subr.mxu0 0.0
    %313 = vmatpush1.msra.mxu0 %v246
    %314 = vmatprep.subr.mxu0 0.0
    %315 = vmatpush1.msra.mxu0 %v247
    %316 = vmatprep.subr.mxu0 0.0
    %317 = vmatpush1.msra.mxu0 %v248
    %318 = vmatprep.subr.mxu0 0.0
    %319 = vmatpush1.msra.mxu0 %v249
    %320 = vmatprep.subr.mxu0 0.0
    %321 = vmatpush1.msra.mxu0 %v250
    %322 = vmatprep.subr.mxu0 0.0
    %323 = vmatpush1.msra.mxu0 %v251
    %324 = vmatprep.subr.mxu0 0.0
    %325 = vmatpush1.msra.mxu0 %v252
    %326 = vmatprep.subr.mxu0 0.0
    %327 = vmatpush1.msra.mxu0 %v253
    %328 = vmatprep.subr.mxu0 0.0
    %329 = vmatpush1.msra.mxu0 %v254
    %330 = vmatprep.subr.mxu0 0.0
    %331 = vmatpush1.msra.mxu0 %v255
    %332 = vmatprep.subr.mxu0 0.0
    %333 = vmatpush1.msra.mxu0 %v256
    %334 = vmatprep.subr.mxu0 0.0
    %335 = vmatpush1.msra.mxu0 %v257
    %336 = vmatprep.subr.mxu0 0.0
    %337 = vmatpush1.msra.mxu0 %v258
    %338 = vmatprep.subr.mxu0 0.0
    %339 = vmatpush1.msra.mxu0 %v259
    %340 = vmatprep.mubr.f32.mxu0 %v226
    %341 = vmatmul.mubr.f32.gmra.mrb[0].mxu0 %v225
    %v342 = vpop.f32.mrb[0].mxu0
    %v343 = vadd.f32 0.0, %v342
    %v344 = vpop.f32.mrb[0].mxu0
    %345 = vdwg.mxu0
    %346 = vmatprep.subr.mxu0 0.0
    %347 = vmatpush1.msra.mxu0 %v260
    %348 = vmatprep.subr.mxu0 0.0
    %349 = vmatpush1.msra.mxu0 %v261
    %350 = vmatprep.subr.mxu0 0.0
    %351 = vmatpush1.msra.mxu0 %v262
    %352 = vmatprep.subr.mxu0 0.0
    %353 = vmatpush1.msra.mxu0 %v263
    %354 = vmatprep.subr.mxu0 0.0
    %355 = vmatpush1.msra.mxu0 %v264
    %356 = vmatprep.subr.mxu0 0.0
    %357 = vmatpush1.msra.mxu0 %v265
    %358 = vmatprep.subr.mxu0 0.0
    %359 = vmatpush1.msra.mxu0 %v266
    %360 = vmatprep.subr.mxu0 0.0
    %361 = vmatpush1.msra.mxu0 %v267
    %362 = vmatprep.subr.mxu0 0.0
    %363 = vmatpush1.msra.mxu0 %v268
    %364 = vmatprep.subr.mxu0 0.0
    %365 = vmatpush1.msra.mxu0 %v269
    %366 = vmatprep.subr.mxu0 0.0
    %367 = vmatpush1.msra.mxu0 %v270
    %368 = vmatprep.subr.mxu0 0.0
    %369 = vmatpush1.msra.mxu0 %v271
    %370 = vmatprep.subr.mxu0 0.0
    %371 = vmatpush1.msra.mxu0 %v272
    %372 = vmatprep.subr.mxu0 0.0
    %373 = vmatpush1.msra.mxu0 %v273
    %374 = vmatprep.subr.mxu0 0.0
    %375 = vmatpush1.msra.mxu0 %v274
    %376 = vmatprep.subr.mxu0 0.0
    %377 = vmatpush1.msra.mxu0 %v275
    %378 = vmatprep.subr.mxu0 0.0
    %379 = vmatpush1.msra.mxu0 0.0
    %380 = vmatprep.subr.mxu0 0.0
    %381 = vmatpush1.msra.mxu0 0.0
    %382 = vmatprep.subr.mxu0 0.0
    %383 = vmatpush1.msra.mxu0 0.0
    %384 = vmatprep.subr.mxu0 0.0
    %385 = vmatpush1.msra.mxu0 0.0
    %386 = vmatprep.subr.mxu0 0.0
    %387 = vmatpush1.msra.mxu0 0.0
    %388 = vmatprep.subr.mxu0 0.0
    %389 = vmatpush1.msra.mxu0 0.0
    %390 = vmatprep.subr.mxu0 0.0
    %391 = vmatpush1.msra.mxu0 0.0
    %392 = vmatprep.subr.mxu0 0.0
    %393 = vmatpush1.msra.mxu0 0.0
    %394 = vmatprep.subr.mxu0 0.0
    %395 = vmatpush1.msra.mxu0 0.0
    %396 = vmatprep.subr.mxu0 0.0
    %397 = vmatpush1.msra.mxu0 0.0
    %398 = vmatprep.subr.mxu0 0.0
    %399 = vmatpush1.msra.mxu0 0.0
    %400 = vmatprep.subr.mxu0 0.0
    %401 = vmatpush1.msra.mxu0 0.0
    %402 = vmatprep.subr.mxu0 0.0
    %403 = vmatpush1.msra.mxu0 0.0
    %404 = vmatprep.subr.mxu0 0.0
    %405 = vmatpush1.msra.mxu0 0.0
    %406 = vmatprep.subr.mxu0 0.0
    %407 = vmatpush1.msra.mxu0 0.0
    %408 = vmatprep.subr.mxu0 0.0
    %409 = vmatpush1.msra.mxu0 0.0
    %410 = vmatprep.mubr.f32.mxu0 0.0
    %411 = vmatmul.mubr.f32.gmra.mrb[0].mxu0 %v227
    %v412 = vpop.f32.mrb[0].mxu0
    %v413 = vadd.f32 %v343, %v412
    %v414 = vpop.f32.mrb[0].mxu0
    %415 = vdwg.mxu0
    %vm416 = vcmask 253952
    %417 = vst.msk [vmem:[#allocation2] sm:$0x1] %vm416, %v413
    // Predicated region
    $region18: #{tpu_custom_call.1} parent=1 // pred_check
      _
    $region19: #{tpu_custom_call.1} parent=1 // pred_check_branch
      %419 = sbr.rel (0) target = $region21
    $region20: #{tpu_custom_call.1} parent=1 // pred_region
      %s421 = ssub.s32 16, 16
      %422 = vsyncadd [#allocation3], %s421
      %s424 = sshll.u32 [#allocation2], 4
      %s425 = int_to_ptr.vmem [resolvable:$true] %s424
      %427 = dma.vmem_to_hbm [thread:$0]  %s425, 16, %s4, [#allocation3]
    $region21: #{tpu_custom_call.1} parent=1 // pred_fallthru
      _
    // Predicated region
    $region22: #{tpu_custom_call.1} parent=1 // pred_check
      _
    $region23: #{tpu_custom_call.1} parent=1 // pred_check_branch
      %429 = sbr.rel (0) target = $region25
    $region24: #{tpu_custom_call.1} parent=1 // pred_region
      %430 = dma.done [#allocation3], 16
    $region25: #{tpu_custom_call.1} parent=1 // pred_fallthru
      _
    %431 = vsyncpa [#allocation3], 1

</llo_original>
